<compile_context>
chip_gen: v6e
topology: v6e:2x2x1
jax: 0.10.0
libtpu: 0.0.40
codegen_flags: <defaults>
</compile_context>

<pallas_src>
import functools

import jax
import jax.numpy as jnp
from jax import lax
from jax.experimental import pallas as pl
from jax.experimental.pallas import tpu as pltpu


def _focal_loss_kernel(wm1_ref, x_ref, t_ref, out_ref, *,
                       gamma, rows, lanes, block_rows, block_lanes,
                       out_rows, out_lanes, mask_rows, mask_lanes):
    """One (block_rows, block_lanes) tile.

    Grid = (row slices [parallel], lane steps [arbitrary]).  The output block
    (out_rows, out_lanes) is resident across all lane steps of a row slice;
    each step folds its tile into it with pure vreg adds (no scratch, no XLU).
    """
    i = pl.program_id(0)
    j = pl.program_id(1)

    @pl.when(j == 0)
    def _():
        out_ref[...] = jnp.zeros_like(out_ref)

    x = x_ref[...].astype(jnp.float32)          # (br, bl) logits
    t = t_ref[...].astype(jnp.float32)          # (br, bl) targets
    wm1 = wm1_ref[...].astype(jnp.float32)      # (br, 1)  pos_weight - 1 (hoisted)

    # Numerically stable BCE-with-logits with pos_weight w:
    #   bce = (1 - t) * x + (1 + (w - 1) * t) * softplus(-x)
    #   softplus(-x) = max(-x, 0) + log1p(exp(-|x|))
    sp_neg_x = jnp.maximum(-x, 0.0) + jnp.log1p(jnp.exp(-jnp.abs(x)))
    bce = (1.0 - t) * x + (1.0 + wm1 * t) * sp_neg_x

    logpt = -bce
    pt = jnp.exp(logpt)
    om = 1.0 - pt
    if gamma == 2:                      # static -> plain VPU multiplies
        mod = om * om
    elif gamma == 1:
        mod = om
    elif gamma == 0:
        mod = jnp.ones_like(om)
    elif isinstance(gamma, int):
        mod = om ** gamma               # integer_pow -> chained multiplies
    else:
        # Non-integer gamma: pt can round slightly above 1 -> om slightly
        # negative -> pow would NaN.  Clamp to keep the EUP pow well defined.
        mod = jnp.maximum(om, 0.0) ** gamma
    fl = -mod * logpt

    # Ragged-tail masking: small (br,1)/(1,bl) iotas, broadcast inside the
    # select.  Select (not multiply) so garbage/Inf/NaN from the block
    # overhang is discarded.  Only emitted when the grid overhangs the array.
    if mask_rows or mask_lanes:
        mask = None
        if mask_rows:
            rid = lax.broadcasted_iota(jnp.int32, (block_rows, 1), 0)
            mask = rid < (rows - i * block_rows)
        if mask_lanes:
            lid = lax.broadcasted_iota(jnp.int32, (1, block_lanes), 1)
            lmask = lid < (lanes - j * block_lanes)
            mask = lmask if mask is None else jnp.logical_and(mask, lmask)
        fl = jnp.where(mask, fl, 0.0)

    # Fold the tile to the resident output block -- pure vreg adds.
    if block_rows != out_rows:
        # (g*8, bl) -> (g, 8, bl) -> sum over sublane-tile groups.
        fl = fl.reshape(block_rows // out_rows, out_rows, block_lanes).sum(axis=0)
    if block_lanes != out_lanes:
        # 128-wide static lane chunks: vreg-column selects + elementwise adds.
        acc = fl[:, :out_lanes]
        for c in range(1, block_lanes // out_lanes):
            acc = acc + fl[:, c * out_lanes:(c + 1) * out_lanes]
        fl = acc

    out_ref[...] += fl


def focal_loss_2d(output, target, weight, *, gamma=2, size_average=True,
                  balance_param=0.25, block_rows=256, block_lanes=4096):
    """output, target: (N, C, H, W); weight: (C,) pos_weight. Returns scalar f32."""
    assert output.shape == target.shape and output.ndim == 4
    N, C, H, W = output.shape
    R, L = N * C, H * W
    total_elems = R * L

    # Pure reshapes: rows = (n, c), lanes = h*w.  Inputs keep their dtype
    # (bf16 streams at half the HBM bytes; the kernel upcasts per tile).
    x2d = output.reshape(R, L)
    t2d = target.reshape(R, L)
    # Per-row (pos_weight - 1): row r = n*C + c -> weight[c].  Tiny, hoisted.
    wrow = jnp.tile(weight.astype(jnp.float32) - 1.0, N)          # (R,)

    # If N*C is small, fold lane groups into rows (pure reshape, zero data
    # movement) so the parallel row axis can reach extent >= 2 (v7x: 2 TCs).
    split = 1
    while (R * split < 16 and L % (2 * split) == 0
           and (L // (2 * split)) % 128 == 0 and (L // (2 * split)) >= 128):
        split *= 2
    if split > 1:
        x2d = x2d.reshape(R * split, L // split)
        t2d = t2d.reshape(R * split, L // split)
        wrow = jnp.repeat(wrow, split)
        R, L = R * split, L // split
    wm1 = wrow.reshape(R, 1)

    # --- block sizing: sublane multiple of packing granularity, lanes of 128 --
    itemsize = x2d.dtype.itemsize
    row_g = {4: 8, 2: 16, 1: 32}.get(itemsize, 8)

    def _rdn(v, m):
        return (v // m) * m

    def _rup(v, m):
        return ((v + m - 1) // m) * m

    if L >= 128:
        bl = max(128, min(_rdn(block_lanes, 128), _rdn(L, 128)))
    else:
        bl = L                                   # full-extent small lane dim
    if R >= row_g:
        br = max(row_g, min(_rdn(block_rows, row_g), _rdn(R, row_g)))
    elif R >= 8:
        br = _rdn(R, 8)
    else:
        br = R                                   # full-extent small row dim
    # Guarantee >= 2 row slices on the parallel axis whenever possible.
    if pl.cdiv(R, br) < 2 and R >= 16:
        br = _rup(pl.cdiv(R, 2), 8)

    grid_rows = pl.cdiv(R, br)
    grid_lanes = pl.cdiv(L, bl)
    mask_rows = (R % br) != 0
    mask_lanes = (L % bl) != 0

    out_rows = 8 if br % 8 == 0 else br
    out_lanes = 128 if bl % 128 == 0 else bl

    g = gamma
    if isinstance(g, float) and float(g).is_integer():
        g = int(g)

    # Explicit VMEM budget: 2 inputs x 2 buffers + (lane-padded) wm1 + output,
    # plus headroom.  Cap at 48 MiB so it fits v7x's 64 MiB physical VMEM.
    vmem_need = (4 * br * bl * itemsize
                 + 2 * br * 128 * 4
                 + 2 * out_rows * out_lanes * 4)
    vmem_limit = int(min(max(vmem_need + (8 << 20), 32 << 20), 48 << 20))

    kernel = functools.partial(
        _focal_loss_kernel, gamma=g, rows=R, lanes=L,
        block_rows=br, block_lanes=bl, out_rows=out_rows, out_lanes=out_lanes,
        mask_rows=mask_rows, mask_lanes=mask_lanes)

    partials = pl.pallas_call(
        kernel,
        out_shape=jax.ShapeDtypeStruct((grid_rows * out_rows, out_lanes),
                                       jnp.float32),
        grid_spec=pltpu.PrefetchScalarGridSpec(
            num_scalar_prefetch=0,
            grid=(grid_rows, grid_lanes),
            in_specs=[
                pl.BlockSpec((br, 1), lambda i, j: (i, 0)),    # pos_weight - 1
                pl.BlockSpec((br, bl), lambda i, j: (i, j)),   # logits tile
                pl.BlockSpec((br, bl), lambda i, j: (i, j)),   # targets tile
            ],
            out_specs=pl.BlockSpec((out_rows, out_lanes), lambda i, j: (i, 0)),
        ),
        compiler_params=pltpu.CompilerParams(
            dimension_semantics=("parallel", "arbitrary"),
            vmem_limit_bytes=vmem_limit),
    )(wm1, x2d, t2d)

    loss_sum = jnp.sum(partials)
    focal = loss_sum / jnp.float32(total_elems) if size_average else loss_sum
    return balance_param * focal


def _reference_focal_loss_2d(output, target, weight, *, gamma=2,
                             size_average=True, balance_param=0.25):
    """Pure-JAX reference matching the PyTorch module."""
    x = output.astype(jnp.float32)
    t = target.astype(jnp.float32)
    w = weight.reshape(1, -1, 1, 1).astype(jnp.float32)
    sp_neg_x = jnp.maximum(-x, 0.0) + jnp.log1p(jnp.exp(-jnp.abs(x)))
    bce = (1.0 - t) * x + (1.0 + (w - 1.0) * t) * sp_neg_x
    logpt = -bce
    pt = jnp.exp(logpt)
    fl = -((1.0 - pt) ** gamma) * logpt
    fl = jnp.mean(fl) if size_average else jnp.sum(fl)
    return balance_param * fl


if __name__ == "__main__":
    key = jax.random.PRNGKey(0)
    k1, k2 = jax.random.split(key)

    N, C, H, W = 2, 4, 16, 16
    output = jax.random.normal(k1, (N, C, H, W), dtype=jnp.float32)
    # Binary targets in {0, 1}, as expected by BCE-with-logits.
    target = (jax.random.uniform(k2, (N, C, H, W)) > 0.5).astype(jnp.float32)
    # Deterministic per-class pos_weight (the module's self.weight).
    weight = 1.0 + 0.5 * jnp.arange(C, dtype=jnp.float32) / C

    loss = focal_loss_2d(output, target, weight, gamma=2,
                         size_average=True, balance_param=0.25)
    loss = jax.block_until_ready(loss)

    ref = _reference_focal_loss_2d(output, target, weight, gamma=2,
                                   size_average=True, balance_param=0.25)
    assert jnp.allclose(loss, ref, rtol=1e-5, atol=1e-6), (loss, ref)

    print("KERNEL_OK")
</pallas_src>

<mosaic_0001>
module attributes {stable_mosaic.version = 11 : i64} {
  func.func @_focal_loss_kernel(%arg0: i32, %arg1: i32, %arg2: memref<8x1xf32, #tpu.memory_space<vmem>>, %arg3: memref<8x128xf32, #tpu.memory_space<vmem>>, %arg4: memref<8x128xf32, #tpu.memory_space<vmem>>, %arg5: memref<8x128xf32, #tpu.memory_space<vmem>>) attributes {dimension_semantics = [#tpu.dimension_semantics<parallel>, #tpu.dimension_semantics<arbitrary>], iteration_bounds = array<i64: 2, 1>, scalar_prefetch = 0 : i64, scratch_operands = 0 : i64, tpu.core_type = #tpu.core_type<tc>, window_params = [{transform_indices = @transform_0, window_bounds = array<i64: 8, 1>}, {transform_indices = @transform_1, window_bounds = array<i64: 8, 128>}, {transform_indices = @transform_2, window_bounds = array<i64: 8, 128>}, {transform_indices = @transform_3, window_bounds = array<i64: 8, 128>}]} {
    %c0_i32 = arith.constant 0 : i32
    %0 = arith.cmpi eq, %arg1, %c0_i32 : i32
    %1 = arith.extui %0 : i1 to i32
    %c0_i32_0 = arith.constant 0 : i32
    %2 = arith.cmpi ne, %1, %c0_i32_0 : i32
    scf.if %2 {
      %cst_17 = arith.constant 0.000000e+00 : f32
      %37 = vector.broadcast %cst_17 : f32 to vector<8x128xf32>
      %c0_18 = arith.constant 0 : index
      %c0_19 = arith.constant 0 : index
      %38 = vector.load %arg5[%c0_18, %c0_19] : memref<8x128xf32, #tpu.memory_space<vmem>>, vector<8x128xf32>
      tpu.vector_store %arg5[%c0_18, %c0_19], %37 {strides = array<i32>} : memref<8x128xf32, #tpu.memory_space<vmem>>, vector<8x128xf32>,
    } else {
    }
    %c0 = arith.constant 0 : index
    %c0_1 = arith.constant 0 : index
    %3 = vector.load %arg3[%c0, %c0_1] : memref<8x128xf32, #tpu.memory_space<vmem>>, vector<8x128xf32>
    %c0_2 = arith.constant 0 : index
    %c0_3 = arith.constant 0 : index
    %4 = vector.load %arg4[%c0_2, %c0_3] : memref<8x128xf32, #tpu.memory_space<vmem>>, vector<8x128xf32>
    %c0_4 = arith.constant 0 : index
    %c0_5 = arith.constant 0 : index
    %5 = vector.load %arg2[%c0_4, %c0_5] : memref<8x1xf32, #tpu.memory_space<vmem>>, vector<8x1xf32>
    %cst = arith.constant 0.000000e+00 : f32
    %6 = vector.broadcast %cst : f32 to vector<8x128xf32>
    %7 = arith.subf %6, %3 : vector<8x128xf32>
    %cst_6 = arith.constant 0.000000e+00 : f32
    %8 = vector.broadcast %cst_6 : f32 to vector<8x128xf32>
    %9 = arith.maximumf %7, %8 : vector<8x128xf32>
    %10 = math.absf %3 : vector<8x128xf32>
    %cst_7 = arith.constant 0.000000e+00 : f32
    %11 = vector.broadcast %cst_7 : f32 to vector<8x128xf32>
    %12 = arith.subf %11, %10 : vector<8x128xf32>
    %13 = math.exp %12 : vector<8x128xf32>
    %14 = math.log1p %13 : vector<8x128xf32>
    %15 = arith.addf %9, %14 : vector<8x128xf32>
    %cst_8 = arith.constant 1.000000e+00 : f32
    %16 = vector.broadcast %cst_8 : f32 to vector<8x128xf32>
    %17 = arith.subf %16, %4 : vector<8x128xf32>
    %18 = arith.mulf %17, %3 : vector<8x128xf32>
    %19 = vector.broadcast %5 : vector<8x1xf32> to vector<8x128xf32>
    %20 = arith.mulf %19, %4 : vector<8x128xf32>
    %cst_9 = arith.constant 1.000000e+00 : f32
    %21 = vector.broadcast %cst_9 : f32 to vector<8x128xf32>
    %22 = arith.addf %21, %20 : vector<8x128xf32>
    %23 = arith.mulf %22, %15 : vector<8x128xf32>
    %24 = arith.addf %18, %23 : vector<8x128xf32>
    %cst_10 = arith.constant 0.000000e+00 : f32
    %25 = vector.broadcast %cst_10 : f32 to vector<8x128xf32>
    %26 = arith.subf %25, %24 : vector<8x128xf32>
    %27 = math.exp %26 : vector<8x128xf32>
    %cst_11 = arith.constant 1.000000e+00 : f32
    %28 = vector.broadcast %cst_11 : f32 to vector<8x128xf32>
    %29 = arith.subf %28, %27 : vector<8x128xf32>
    %30 = arith.mulf %29, %29 : vector<8x128xf32>
    %cst_12 = arith.constant 0.000000e+00 : f32
    %31 = vector.broadcast %cst_12 : f32 to vector<8x128xf32>
    %32 = arith.subf %31, %30 : vector<8x128xf32>
    %33 = arith.mulf %32, %26 : vector<8x128xf32>
    %c0_13 = arith.constant 0 : index
    %c0_14 = arith.constant 0 : index
    %34 = vector.load %arg5[%c0_13, %c0_14] : memref<8x128xf32, #tpu.memory_space<vmem>>, vector<8x128xf32>
    %35 = arith.addf %34, %33 : vector<8x128xf32>
    %c0_15 = arith.constant 0 : index
    %c0_16 = arith.constant 0 : index
    %36 = vector.load %arg5[%c0_15, %c0_16] : memref<8x128xf32, #tpu.memory_space<vmem>>, vector<8x128xf32>
    tpu.vector_store %arg5[%c0_15, %c0_16], %35 {strides = array<i32>} : memref<8x128xf32, #tpu.memory_space<vmem>>, vector<8x128xf32>,
    return
  }
  func.func @transform_0(%arg0: i32, %arg1: i32) -> (i32, i32) {
    %c0_i32 = arith.constant 0 : i32
    %c0_i32_0 = arith.constant 0 : i32
    return %arg0, %c0_i32 : i32, i32
  }
  func.func @transform_1(%arg0: i32, %arg1: i32) -> (i32, i32) {
    %c0_i32 = arith.constant 0 : i32
    return %arg0, %arg1 : i32, i32
  }
  func.func @transform_2(%arg0: i32, %arg1: i32) -> (i32, i32) {
    %c0_i32 = arith.constant 0 : i32
    return %arg0, %arg1 : i32, i32
  }
  func.func @transform_3(%arg0: i32, %arg1: i32) -> (i32, i32) {
    %c0_i32 = arith.constant 0 : i32
    %c0_i32_0 = arith.constant 0 : i32
    return %arg0, %c0_i32 : i32, i32
  }
}

</mosaic_0001>

<llo_original>
// kernel: tpu_custom_call.1
$region0: #{tpu_custom_call.1}
  #allocation0 [shape = 'u32[]', space=smem, size = 0x4, offset = 0x4, fixed_abs, tag = 'smem constant byte address 0x4 - core index']
  #allocation1 [shape = 'u32[144,128]{1,0:T(1,128)}', space=vmem, size = 0x12000, scoped, tag = 'internal scratch']
  %s0 = inlined_call_operand.vmem [shape: f32[16,1], index: 0, kind: input, shape index: {}]
  %s1 = inlined_call_operand.vmem [shape: f32[16,128], index: 1, kind: input, shape index: {}]
  %s2 = inlined_call_operand.hbm [shape: f32[16,128], index: 2, kind: input, shape index: {}]
  %s3 = inlined_call_operand.hbm [shape: f32[16,128], index: 3, kind: output, shape index: {}]
  %s4 = sld [smem:[#allocation0]]
  $region53: #{tpu_custom_call.1} parent=0
    _
  %s6 = ssub.s32 1, %s4
  %s7 = scalar_select 0, %s6, %s4
  $region1: #{tpu_custom_call.1} parent=0
    #allocation2 [shape = 'u8[8192]{0}', space=vmem, size = 0x2000, scoped, tag = 'input window, operand 2']
    #allocation3 [shape = 's32[2]{0}', space=sflag, size = 0x8, scoped, tag = 'scoped memory for tpu_custom_call.1']
    #allocation4 [shape = 's32[2]{0}', space=sflag, size = 0x8, scoped, tag = 'scoped memory for tpu_custom_call.1']
    #allocation5 [shape = 'u8[8192]{0}', space=vmem, size = 0x2000, scoped, tag = 'output window, operand 0']
    %8 = vsyncpa [#allocation3], 0
    %s9 = scalar_lea.sflag [#allocation3], 1
    %10 = vsyncpa %s9, 0
    %11 = vsyncpa [#allocation4], 0
    %s12 = scalar_lea.sflag [#allocation4], 1
    %13 = vsyncpa %s12, 0
    loop: start=0, step=1, limit=4
    $region2: #{tpu_custom_call.1} parent=1 // loop_pre_header
      _
    $region3: #{tpu_custom_call.1} parent=1 // loop_header
      %s15 = sphi 0, %s19
      %p16 = scmp.ge.s32.totalorder %s15, 4
      %s22 = sphi 0, %s34
      %s23 = sphi 0, %s30
      %s24 = sphi 0, %s22
      %s25 = sphi 0, %s23
      %s26 = sphi 0, %s24
      %s27 = sphi 0, %s25
      %s37 = sphi 0, %s39
      %s40 = sphi 0, %s37
      %s41 = sphi 0, %s40
      %s57 = sphi 0, %s41
      %s65 = sphi 0, %s67
      %s68 = sphi 0, %s65
      %s69 = sphi 0, %s68
      %s85 = sphi 0, %s69
      %s93 = sphi 0, %s95
      %s96 = sphi 0, %s93
      %s97 = sphi 0, %s96
      %s113 = sphi 0, %s97
      %s119 = sphi 0, %s121
      %s122 = sphi 0, %s119
      %s123 = sphi 0, %s122
      %s139 = sphi 0, %s123
    $region4: #{tpu_custom_call.1} parent=1 // loop_header_branch
      %18 = sbr.rel (%p16) target = $region8
    $region5: #{tpu_custom_call.1} parent=1 // loop_body
      %s20 = ssub.s32 %s15, 1
      %s21 = ssub.s32 %s15, 2
      %s28 = sadd.s32 1, %s23
      %p29 = scmp.ge.s32.totalorder %s28, 1
      %s30 = scalar_select %p29, 0, %s28
      %s31 = sadd.s32 1, %s22
      %s32 = scalar_select %p29, %s31, %s22
      %p33 = scmp.ge.s32.totalorder %s32, 2
      %s34 = scalar_select %p33, 0, %s32
      %s35 = ssub.s32 %s22, %s34
      %p36 = scmp.eq.s32.totalorder %s35, 0
      %s38 = sadd.s32 %s37, 1
      %s39 = scalar_select %p36, %s37, %s38
      %p42 = pneg %p36
      %p43 = scmp.eq.s32.totalorder %s15, 1
      %p44 = por %p42, %p43
      %p45 = scmp.ne.s32.totalorder %s37, %s40
      %p46 = scmp.eq.s32.totalorder %s15, 0
      %p47 = por %p45, %p46
      %p48 = scmp.ne.s32.totalorder %s37, %s40
      %p49 = scmp.eq.s32.totalorder %s20, 1
      %p50 = por %p48, %p49
      %p51 = scmp.ne.s32.totalorder %s40, %s41
      %p52 = scmp.eq.s32.totalorder %s20, 0
      %p53 = por %p51, %p52
      %p54 = scmp.ne.s32.totalorder %s40, %s41
      %p55 = scmp.eq.s32.totalorder %s21, 1
      %p56 = por %p54, %p55
      %p58 = scmp.ne.s32.totalorder %s41, %s57
      %p59 = scmp.eq.s32.totalorder %s21, 0
      %p60 = por %p58, %p59
      %s61 = ssub.s32 %s22, %s34
      %s62 = ssub.s32 %s23, %s30
      %s63 = sor.u32 %s61, %s62
      %p64 = scmp.eq.s32.totalorder %s63, 0
      %s66 = sadd.s32 %s65, 1
      %s67 = scalar_select %p64, %s65, %s66
      %p70 = pneg %p64
      %p71 = scmp.eq.s32.totalorder %s15, 1
      %p72 = por %p70, %p71
      %p73 = scmp.ne.s32.totalorder %s65, %s68
      %p74 = scmp.eq.s32.totalorder %s15, 0
      %p75 = por %p73, %p74
      %p76 = scmp.ne.s32.totalorder %s65, %s68
      %p77 = scmp.eq.s32.totalorder %s20, 1
      %p78 = por %p76, %p77
      %p79 = scmp.ne.s32.totalorder %s68, %s69
      %p80 = scmp.eq.s32.totalorder %s20, 0
      %p81 = por %p79, %p80
      %p82 = scmp.ne.s32.totalorder %s68, %s69
      %p83 = scmp.eq.s32.totalorder %s21, 1
      %p84 = por %p82, %p83
      %p86 = scmp.ne.s32.totalorder %s69, %s85
      %p87 = scmp.eq.s32.totalorder %s21, 0
      %p88 = por %p86, %p87
      %s89 = ssub.s32 %s22, %s34
      %s90 = ssub.s32 %s23, %s30
      %s91 = sor.u32 %s89, %s90
      %p92 = scmp.eq.s32.totalorder %s91, 0
      %s94 = sadd.s32 %s93, 1
      %s95 = scalar_select %p92, %s93, %s94
      %p98 = pneg %p92
      %p99 = scmp.eq.s32.totalorder %s15, 1
      %p100 = por %p98, %p99
      %p101 = scmp.ne.s32.totalorder %s93, %s96
      %p102 = scmp.eq.s32.totalorder %s15, 0
      %p103 = por %p101, %p102
      %p104 = scmp.ne.s32.totalorder %s93, %s96
      %p105 = scmp.eq.s32.totalorder %s20, 1
      %p106 = por %p104, %p105
      %p107 = scmp.ne.s32.totalorder %s96, %s97
      %p108 = scmp.eq.s32.totalorder %s20, 0
      %p109 = por %p107, %p108
      %p110 = scmp.ne.s32.totalorder %s96, %s97
      %p111 = scmp.eq.s32.totalorder %s21, 1
      %p112 = por %p110, %p111
      %p114 = scmp.ne.s32.totalorder %s97, %s113
      %p115 = scmp.eq.s32.totalorder %s21, 0
      %p116 = por %p114, %p115
      %s117 = ssub.s32 %s22, %s34
      %p118 = scmp.eq.s32.totalorder %s117, 0
      %s120 = sadd.s32 %s119, 1
      %s121 = scalar_select %p118, %s119, %s120
      %p124 = pneg %p118
      %p125 = scmp.eq.s32.totalorder %s15, 1
      %p126 = por %p124, %p125
      %p127 = scmp.ne.s32.totalorder %s119, %s122
      %p128 = scmp.eq.s32.totalorder %s15, 0
      %p129 = por %p127, %p128
      %p130 = scmp.ne.s32.totalorder %s119, %s122
      %p131 = scmp.eq.s32.totalorder %s20, 1
      %p132 = por %p130, %p131
      %p133 = scmp.ne.s32.totalorder %s122, %s123
      %p134 = scmp.eq.s32.totalorder %s20, 0
      %p135 = por %p133, %p134
      %p136 = scmp.ne.s32.totalorder %s122, %s123
      %p137 = scmp.eq.s32.totalorder %s21, 1
      %p138 = por %p136, %p137
      %p140 = scmp.ne.s32.totalorder %s123, %s139
      %p141 = scmp.eq.s32.totalorder %s21, 0
      %p142 = por %p140, %p141
      %p143 = scmp.le.s32.totalorder 1, %s15
      %p144 = scmp.lt.s32.totalorder %s15, 3
      %p145 = pnand %p143, %p144
      %p146 = pneg %p145
      // Predicated region
      $region9: #{tpu_custom_call.1} parent=5 // pred_check
        _
      $region10: #{tpu_custom_call.1} parent=5 // pred_check_branch
        %148 = sbr.rel (%p145) target = $region12
      $region11: #{tpu_custom_call.1} parent=5 // pred_region
        %s149 = ssub.s32 %s15, 1
      $region12: #{tpu_custom_call.1} parent=5 // pred_fallthru
        _
      %p150 = scmp.lt.s32.totalorder %s15, 2
      // Predicated region
      $region13: #{tpu_custom_call.1} parent=5 // pred_check
        %p151 = pneg %p150
      $region14: #{tpu_custom_call.1} parent=5 // pred_check_branch
        %153 = sbr.rel (%p151) target = $region16
      $region15: #{tpu_custom_call.1} parent=5 // pred_region
        // Predicated region
        $region17: #{tpu_custom_call.1} parent=15 // pred_check
          %p154 = pneg %p47
        $region18: #{tpu_custom_call.1} parent=15 // pred_check_branch
          %156 = sbr.rel (%p154) target = $region20
        $region19: #{tpu_custom_call.1} parent=15 // pred_region
          %p157 = scmp.lt.s32.totalorder %s22, 1
          %s158 = scalar_select %p157, %s22, 1
          %s159 = smul.addr %s158, 8
          %s160 = scalar_lea.vmem %s0, %s159
        $region20: #{tpu_custom_call.1} parent=15 // pred_fallthru
          _
        // Predicated region
        $region21: #{tpu_custom_call.1} parent=15 // pred_check
          %p161 = pneg %p75
        $region22: #{tpu_custom_call.1} parent=15 // pred_check_branch
          %163 = sbr.rel (%p161) target = $region24
        $region23: #{tpu_custom_call.1} parent=15 // pred_region
          %p164 = scmp.lt.s32.totalorder %s22, 1
          %s165 = scalar_select %p164, %s22, 1
          %p166 = scmp.lt.s32.totalorder %s23, 0
          %s167 = scalar_select %p166, %s23, 0
          %s168 = sadd.s32 %s167, %s165
          %s169 = smul.addr %s168, 8
          %s170 = scalar_lea.vmem %s1, %s169
        $region24: #{tpu_custom_call.1} parent=15 // pred_fallthru
          _
        // Predicated region
        $region25: #{tpu_custom_call.1} parent=15 // pred_check
          %p171 = pneg %p103
        $region26: #{tpu_custom_call.1} parent=15 // pred_check_branch
          %173 = sbr.rel (%p171) target = $region28
        $region27: #{tpu_custom_call.1} parent=15 // pred_region
          %s174 = sand.u32 %s93, 1
          %s175 = scalar_lea.sflag [#allocation3], %s174
          %s176 = sand.u32 %s93, 1
          %s177 = smul.addr %s176, 8
          %s178 = scalar_lea.vmem [#allocation2], %s177
          %s180 = ssub.s32 128, 128
          %181 = vsyncadd %s175, %s180
          %s182 = sadd.s32 %s23, %s22
          %s183 = smul.addr %s182, 128
          %s184 = scalar_lea.hbm %s2, %s183
          %s186 = sshll.u32 %s178, 4
          %s187 = int_to_ptr.vmem [resolvable:$true] %s186
          %189 = dma.hbm_to_vmem [thread:$0]  %s184, 128, %s187, %s175
        $region28: #{tpu_custom_call.1} parent=15 // pred_fallthru
          _
      $region16: #{tpu_custom_call.1} parent=5 // pred_fallthru
        _
      %p190 = scmp.le.s32.totalorder 1, %s15
      %p191 = scmp.lt.s32.totalorder %s15, 3
      %p192 = pnand %p190, %p191
      %p193 = pneg %p192
      // Predicated region
      $region29: #{tpu_custom_call.1} parent=5 // pred_check
        _
      $region30: #{tpu_custom_call.1} parent=5 // pred_check_branch
        %195 = sbr.rel (%p192) target = $region32
      $region31: #{tpu_custom_call.1} parent=5 // pred_region
        %s196 = ssub.s32 %s15, 1
        %s197 = sand.u32 %s96, 1
        %s198 = scalar_lea.sflag [#allocation3], %s197
        %s199 = sand.u32 %s96, 1
        %s200 = smul.addr %s199, 8
        %s201 = scalar_lea.vmem [#allocation2], %s200
        // Predicated region
        $region33: #{tpu_custom_call.1} parent=31 // pred_check
          %p202 = pneg %p109
        $region34: #{tpu_custom_call.1} parent=31 // pred_check_branch
          %204 = sbr.rel (%p202) target = $region36
        $region35: #{tpu_custom_call.1} parent=31 // pred_region
          %205 = dma.done %s198, 128
        $region36: #{tpu_custom_call.1} parent=31 // pred_fallthru
          _
        %p206 = scmp.lt.s32.totalorder %s24, 1
        %s207 = scalar_select %p206, %s24, 1
        %s208 = smul.addr %s207, 8
        %s209 = scalar_lea.vmem %s0, %s208
        %p210 = pneg %p53
        %p211 = pneg %p50
        %p212 = scmp.lt.s32.totalorder %s24, 1
        %s213 = scalar_select %p212, %s24, 1
        %p214 = scmp.lt.s32.totalorder %s25, 0
        %s215 = scalar_select %p214, %s25, 0
        %s216 = sadd.s32 %s215, %s213
        %s217 = smul.addr %s216, 8
        %s218 = scalar_lea.vmem %s1, %s217
        %p219 = pneg %p81
        %p220 = pneg %p78
        %s221 = sand.u32 %s96, 1
        %s222 = scalar_lea.sflag [#allocation3], %s221
        %s223 = sand.u32 %s96, 1
        %s224 = smul.addr %s223, 8
        %s225 = scalar_lea.vmem [#allocation2], %s224
        %p226 = pneg %p109
        %p227 = pneg %p106
        %p228 = pneg %p135
        %p229 = pneg %p132
        %s230 = sand.u32 %s122, 1
        %s231 = scalar_lea.sflag [#allocation4], %s230
        %s232 = sand.u32 %s122, 1
        %s233 = smul.addr %s232, 8
        %s234 = scalar_lea.vmem [#allocation5], %s233
        %p235 = scmp.lt.s32.totalorder %s24, 1
        %s236 = scalar_select %p235, %s24, 1
        %s237 = smul.addr %s236, 8
        %s238 = scalar_lea.vmem %s0, %s237
        %p239 = scmp.lt.s32.totalorder %s24, 1
        %s240 = scalar_select %p239, %s24, 1
        %p241 = scmp.lt.s32.totalorder %s25, 0
        %s242 = scalar_select %p241, %s25, 0
        %s243 = sadd.s32 %s242, %s240
        %s244 = smul.addr %s243, 8
        %s245 = scalar_lea.vmem %s1, %s244
        %p246 = scmp.eq.s32.totalorder %s25, 0
        // Predicated region
        $region37: #{tpu_custom_call.1} parent=31 // pred_check
          %p247 = pneg %p246
        $region38: #{tpu_custom_call.1} parent=31 // pred_check_branch
          %249 = sbr.rel (%p247) target = $region40
        $region39: #{tpu_custom_call.1} parent=31 // pred_region
          %250 = vst [vmem:[%s234] sm:$0xff] 0.0
        $region40: #{tpu_custom_call.1} parent=31 // pred_fallthru
          _
        %v251 = vld [vmem:[%s245] sm:$0xff]
        %v252 = vld [vmem:[%s201] sm:$0xff]
        %v253 = vld [vmem:[%s238] sm:$0xff]
        %v254 = vsub.f32 0.0, %v251
        %v255 = vmax.f32 %v254, 0.0
        %v256 = vand.u32 2147483647, %v251
        %v257 = vsub.f32 0.0, %v256
        %v258 = vmul.f32 %v257, 1.442695
        %v259 = vpow.pop %v258
        %v260 = vadd.f32 %v259, 1.0
        %v261 = vlog2.pop %v260
        %v262 = vmul.f32 %v261, 0.6931472
        %v263 = vmul.f32 -0.5, %v259
        %v264 = vadd.f32 %v263, 1.0
        %v265 = vmul.f32 %v264, %v259
        %v266 = vand.u32 2147483647, %v259
        %vm267 = vcmp.lt.f32.partialorder %v266, 0.0004427343
        %v268 = vsel %vm267, %v265, %v262
        %v269 = vadd.f32 %v255, %v268
        %v270 = vsub.f32 1.0, %v252
        %v271 = vmul.f32 %v270, %v251
        %273 = vset.pattern.permute.xlu0 0
        %274 = vperm.xlu0 %273, %v253
        %v275 = vpop.permute.xlu0 %274
        %v277 = vmul.f32 %v275, %v252
        %v278 = vadd.f32 %v277, 1.0
        %v279 = vmul.f32 %v278, %v269
        %v280 = vadd.f32 %v271, %v279
        %v281 = vsub.f32 0.0, %v280
        %v282 = vmul.f32 %v281, 1.442695
        %v283 = vpow.pop %v282
        %v284 = vsub.f32 1.0, %v283
        %v285 = vmul.f32 %v284, %v284
        %v286 = vsub.f32 0.0, %v285
        %v287 = vmul.f32 %v286, %v281
        %v288 = vld [vmem:[%s234] sm:$0xff]
        %v289 = vadd.f32 %v288, %v287
        %290 = vst [vmem:[%s234] sm:$0xff] %v289
        %s291 = sand.u32 %s122, 1
        %s292 = scalar_lea.sflag [#allocation4], %s291
        %s293 = sand.u32 %s122, 1
        %s294 = smul.addr %s293, 8
        %s295 = scalar_lea.vmem [#allocation5], %s294
        // Predicated region
        $region41: #{tpu_custom_call.1} parent=31 // pred_check
          %p296 = pneg %p132
        $region42: #{tpu_custom_call.1} parent=31 // pred_check_branch
          %298 = sbr.rel (%p296) target = $region44
        $region43: #{tpu_custom_call.1} parent=31 // pred_region
          %s300 = ssub.s32 128, 128
          %301 = vsyncadd %s292, %s300
          %s302 = smul.addr %s24, 128
          %s303 = scalar_lea.hbm %s3, %s302
          %s305 = sshll.u32 %s295, 4
          %s306 = int_to_ptr.vmem [resolvable:$true] %s305
          %308 = dma.vmem_to_hbm [thread:$0]  %s306, 128, %s303, %s292
        $region44: #{tpu_custom_call.1} parent=31 // pred_fallthru
          _
      $region32: #{tpu_custom_call.1} parent=5 // pred_fallthru
        _
      %p309 = scmp.le.s32.totalorder 2, %s15
      // Predicated region
      $region45: #{tpu_custom_call.1} parent=5 // pred_check
        %p310 = pneg %p309
      $region46: #{tpu_custom_call.1} parent=5 // pred_check_branch
        %312 = sbr.rel (%p310) target = $region48
      $region47: #{tpu_custom_call.1} parent=5 // pred_region
        %s313 = ssub.s32 %s15, 2
        // Predicated region
        $region49: #{tpu_custom_call.1} parent=47 // pred_check
          %p314 = pneg %p138
        $region50: #{tpu_custom_call.1} parent=47 // pred_check_branch
          %316 = sbr.rel (%p314) target = $region52
        $region51: #{tpu_custom_call.1} parent=47 // pred_region
          %s317 = sand.u32 %s123, 1
          %s318 = scalar_lea.sflag [#allocation4], %s317
          %s319 = sand.u32 %s123, 1
          %s320 = smul.addr %s319, 8
          %s321 = scalar_lea.vmem [#allocation5], %s320
          %322 = dma.done %s318, 128
        $region52: #{tpu_custom_call.1} parent=47 // pred_fallthru
          _
      $region48: #{tpu_custom_call.1} parent=5 // pred_fallthru
        _
    $region6: #{tpu_custom_call.1} parent=1 // loop_footer
      %s19 = sadd.s32 1, %s15
    $region7: #{tpu_custom_call.1} parent=1 // loop_footer_branch
      %14 = sbr.rel target = $region3
    $region8: #{tpu_custom_call.1} parent=1 // loop_exit
      _
    %323 = vsyncpa [#allocation3], 1
    %s324 = scalar_lea.sflag [#allocation3], 1
    %325 = vsyncpa %s324, 1
    %326 = vsyncpa [#allocation4], 1
    %s327 = scalar_lea.sflag [#allocation4], 1
    %328 = vsyncpa %s327, 1

</llo_original>
